<compile_context>
chip_gen: v7x
topology: tpu7x:2x2x1
jax: 0.10.0
libtpu: 0.0.40
codegen_flags: <defaults>
</compile_context>

<pallas_src>
import numpy as np
import jax
import jax.numpy as jnp
from jax.experimental import pallas as pl
from jax.experimental.pallas import tpu as pltpu


_MIB = 1024 * 1024
_MAX_TILE_BYTES = 4 * _MIB      # per-buffer tile cap (x / pe / out each)
_VMEM_LIMIT_CAP = 48 * _MIB     # leave headroom inside v7x's 64 MiB VMEM


def make_sinusoidal_encoding(d_model: int, max_len: int) -> jnp.ndarray:
    """Deterministic construction mirroring the PyTorch __init__ (float32)."""
    position = np.arange(0, max_len, dtype=np.float32)[:, None]            # (L, 1)
    div_term = np.exp(np.arange(0, d_model, 2, dtype=np.float32)
                      * (-np.log(10000.0) / d_model))                      # (ceil(D/2),)
    enc = np.zeros((max_len, d_model), dtype=np.float32)
    enc[:, 0::2] = np.sin(position * div_term)
    enc[:, 1::2] = np.cos(position * div_term[: enc[:, 1::2].shape[1]])
    return jnp.asarray(enc[None, :, :])                                    # (1, L, D)


def _sublane_multiple(dtype) -> int:
    """Packed sublane granularity: 8 for f32, 16 for bf16, 32 for int8/fp8."""
    return max(8, 32 // jnp.dtype(dtype).itemsize)


def _add_pe_rows_kernel(x_ref, pe_ref, o_ref):
    # x_ref/o_ref: (1, tS, D); pe_ref: (1, tS, D) -- shape-matched vadd,
    # computed in the promoted dtype, stored in the output dtype.
    o_ref[...] = (x_ref[...] + pe_ref[...]).astype(o_ref.dtype)


def _add_pe_lanes_kernel(x_ref, pe_ref, o_ref):
    # x_ref/o_ref: (B, tC); pe_ref: (1, tC) broadcast over the batch rows.
    o_ref[...] = (x_ref[...] + pe_ref[...]).astype(o_ref.dtype)


def _choose_row_tile(S: int, row_bytes: int, gran: int) -> int:
    """Largest dtype-aligned row count within the byte cap (or full S)."""
    cap_rows = max(gran, _MAX_TILE_BYTES // max(1, row_bytes))
    if S <= cap_rows:
        return S                       # single block == full dim -> always legal
    return max(gran, (cap_rows // gran) * gran)


def _choose_col_tile(N: int, row_count: int, itemsize: int) -> int:
    """Largest multiple of 128 lanes within the byte cap (or full N)."""
    cap = max(128, _MAX_TILE_BYTES // max(1, row_count * itemsize))
    if N <= cap:
        return N                       # single block == full dim -> always legal
    return max(128, (cap // 128) * 128)


def _compiler_params(semantics, block_bytes):
    # block_bytes = combined x/pe/out tile bytes; x4 covers double-buffering
    # plus compiler-internal scratch slack, clamped to fit every generation.
    vmem_limit = int(min(_VMEM_LIMIT_CAP, max(32 * _MIB, 4 * block_bytes)))
    return pltpu.CompilerParams(
        dimension_semantics=semantics,
        vmem_limit_bytes=vmem_limit,
    )


def positional_encoding_forward(x: jnp.ndarray, encoding: jnp.ndarray) -> jnp.ndarray:
    """x: (B, S, D); encoding: (1, max_len, D). Returns x + encoding[:, :S, :]."""
    B, S, D = x.shape
    max_len = encoding.shape[1]
    if S > max_len:
        raise ValueError(f"sequence length {S} exceeds max_len {max_len}")

    # Match PyTorch type promotion: bf16 x + f32 table -> f32 output.
    out_dtype = jnp.promote_types(x.dtype, encoding.dtype)
    pe = encoding[:, :S, :].astype(out_dtype)          # (1, S, D), tiny slice

    x_item = jnp.dtype(x.dtype).itemsize
    pe_item = jnp.dtype(pe.dtype).itemsize
    out_item = jnp.dtype(out_dtype).itemsize

    if D % 128 == 0:
        # ---------------- row-tiled 3-D path (lane-dense last dim) ----------------
        gran = max(_sublane_multiple(x.dtype), _sublane_multiple(pe.dtype),
                   _sublane_multiple(out_dtype))
        row_bytes = D * max(x_item, pe_item, out_item)
        tS = _choose_row_tile(S, row_bytes, gran)
        n_s = pl.cdiv(S, tS)
        block_bytes = tS * D * (x_item + pe_item + out_item)

        # Grid (n_s, B): b innermost -> PE block index constant across the inner
        # loop, so its DMA is issued once per s-block (reuse survives megacore
        # sharding since n_s is the outer "parallel" axis).
        # TODO(synk): optionally add input_output_aliases={0: 0} with donated x.
        return pl.pallas_call(
            _add_pe_rows_kernel,
            out_shape=jax.ShapeDtypeStruct((B, S, D), out_dtype),
            grid_spec=pltpu.PrefetchScalarGridSpec(
                num_scalar_prefetch=0,
                grid=(n_s, B),
                in_specs=[
                    pl.BlockSpec((1, tS, D), lambda s, b: (b, s, 0)),   # x tile
                    pl.BlockSpec((1, tS, D), lambda s, b: (0, s, 0)),   # PE tile (b-invariant)
                ],
                out_specs=pl.BlockSpec((1, tS, D), lambda s, b: (b, s, 0)),
            ),
            compiler_params=_compiler_params(("parallel", "arbitrary"), block_bytes),
        )(x, pe)

    # ---------------- lane-folded 2-D path (D < 128 or not 128-aligned) ----------------
    N = S * D
    x2 = x.reshape(B, N)                               # free reshape (contiguous)
    pe2 = pe.reshape(1, N)
    tC = _choose_col_tile(N, B, max(x_item, pe_item, out_item))
    n_c = pl.cdiv(N, tC)
    block_bytes = tC * (B * x_item + pe_item + B * out_item)

    out2 = pl.pallas_call(
        _add_pe_lanes_kernel,
        out_shape=jax.ShapeDtypeStruct((B, N), out_dtype),
        grid_spec=pltpu.PrefetchScalarGridSpec(
            num_scalar_prefetch=0,
            grid=(n_c,),
            in_specs=[
                pl.BlockSpec((B, tC), lambda c: (0, c)),        # x tile (full batch rows)
                pl.BlockSpec((1, tC), lambda c: (0, c)),        # PE tile (broadcast over batch)
            ],
            out_specs=pl.BlockSpec((B, tC), lambda c: (0, c)),
        ),
        compiler_params=_compiler_params(("parallel",), block_bytes),
    )(x2, pe2)
    return out2.reshape(B, S, D)


if __name__ == "__main__":
    k1, k2, k3 = jax.random.split(jax.random.PRNGKey(0), 3)

    # Case 1: d_model < 128 -> lane-folded 2-D path.
    B1, S1, D1, L1 = 2, 8, 32, 64
    enc1 = make_sinusoidal_encoding(D1, L1)
    x1 = jax.random.normal(k1, (B1, S1, D1), dtype=jnp.float32)
    out1 = jax.block_until_ready(positional_encoding_forward(x1, enc1))
    ref1 = x1 + enc1[:, :S1, :]
    np.testing.assert_allclose(np.asarray(out1), np.asarray(ref1), rtol=1e-6, atol=1e-6)

    # Case 2: d_model multiple of 128 -> row-tiled 3-D path (batch-innermost grid).
    B2, S2, D2, L2 = 2, 16, 128, 32
    enc2 = make_sinusoidal_encoding(D2, L2)
    x2 = jax.random.normal(k2, (B2, S2, D2), dtype=jnp.float32)
    out2 = jax.block_until_ready(positional_encoding_forward(x2, enc2))
    ref2 = x2 + enc2[:, :S2, :]
    np.testing.assert_allclose(np.asarray(out2), np.asarray(ref2), rtol=1e-6, atol=1e-6)

    # Case 3: bf16 activations -> add in float32 (PyTorch-style promotion).
    B3, S3, D3, L3 = 2, 16, 128, 32
    enc3 = make_sinusoidal_encoding(D3, L3)
    x3 = jax.random.normal(k3, (B3, S3, D3), dtype=jnp.float32).astype(jnp.bfloat16)
    out3 = jax.block_until_ready(positional_encoding_forward(x3, enc3))
    ref3 = x3 + enc3[:, :S3, :]                      # bf16 + f32 -> f32
    assert out3.dtype == jnp.float32
    np.testing.assert_allclose(np.asarray(out3), np.asarray(ref3), rtol=1e-6, atol=1e-6)

    print("KERNEL_OK")
</pallas_src>

<mosaic_0001>
module attributes {stable_mosaic.version = 11 : i64} {
  func.func @_add_pe_lanes_kernel(%arg0: i32, %arg1: memref<2x256xf32, #tpu.memory_space<vmem>>, %arg2: memref<1x256xf32, #tpu.memory_space<vmem>>, %arg3: memref<2x256xf32, #tpu.memory_space<vmem>>) attributes {dimension_semantics = [#tpu.dimension_semantics<parallel>], iteration_bounds = array<i64: 1>, scalar_prefetch = 0 : i64, scratch_operands = 0 : i64, tpu.core_type = #tpu.core_type<tc>, window_params = [{transform_indices = @transform_0, window_bounds = array<i64: 2, 256>}, {transform_indices = @transform_1, window_bounds = array<i64: 1, 256>}, {transform_indices = @transform_2, window_bounds = array<i64: 2, 256>}]} {
    %c0 = arith.constant 0 : index
    %c0_0 = arith.constant 0 : index
    %0 = vector.load %arg1[%c0, %c0_0] : memref<2x256xf32, #tpu.memory_space<vmem>>, vector<2x256xf32>
    %c0_1 = arith.constant 0 : index
    %c0_2 = arith.constant 0 : index
    %1 = vector.load %arg2[%c0_1, %c0_2] : memref<1x256xf32, #tpu.memory_space<vmem>>, vector<1x256xf32>
    %2 = vector.broadcast %1 : vector<1x256xf32> to vector<2x256xf32>
    %3 = arith.addf %0, %2 : vector<2x256xf32>
    %c0_3 = arith.constant 0 : index
    %c0_4 = arith.constant 0 : index
    %4 = vector.load %arg3[%c0_3, %c0_4] : memref<2x256xf32, #tpu.memory_space<vmem>>, vector<2x256xf32>
    tpu.vector_store %arg3[%c0_3, %c0_4], %3 {strides = array<i32>} : memref<2x256xf32, #tpu.memory_space<vmem>>, vector<2x256xf32>,
    return
  }
  func.func @transform_0(%arg0: i32) -> (i32, i32) {
    %c0_i32 = arith.constant 0 : i32
    %c0_i32_0 = arith.constant 0 : i32
    return %c0_i32, %arg0 : i32, i32
  }
  func.func @transform_1(%arg0: i32) -> (i32, i32) {
    %c0_i32 = arith.constant 0 : i32
    %c0_i32_0 = arith.constant 0 : i32
    return %c0_i32, %arg0 : i32, i32
  }
  func.func @transform_2(%arg0: i32) -> (i32, i32) {
    %c0_i32 = arith.constant 0 : i32
    %c0_i32_0 = arith.constant 0 : i32
    return %c0_i32, %arg0 : i32, i32
  }
}

</mosaic_0001>

<llo_original>
// kernel: tpu_custom_call.1
$region0: #{tpu_custom_call.1}
  #allocation0 [shape = 'u32[]', space=smem, size = 0x4, offset = 0x4, fixed_abs, tag = 'smem constant byte address 0x4 - core index']
  #allocation1 [shape = 'u32[144,128]{1,0:T(1,128)}', space=vmem, size = 0x12000, scoped, tag = 'internal scratch']
  %s0 = inlined_call_operand.hbm [shape: f32[2,256], index: 0, kind: input, shape index: {}]
  %s1 = inlined_call_operand.vmem [shape: f32[1,256], index: 1, kind: input, shape index: {}]
  %s2 = inlined_call_operand.hbm [shape: f32[2,256], index: 2, kind: output, shape index: {}]
  %s3 = sld [smem:[#allocation0]]
  $region22: #{tpu_custom_call.1} parent=0
    _
  %s5 = ssub.s32 1, %s3
  %s6 = scalar_select 0, %s5, %s3
  $region1: #{tpu_custom_call.1} parent=0
    #allocation2 [shape = 'u8[2048]{0}', space=vmem, size = 0x800, scoped, tag = 'input window, operand 0, single buffered']
    #allocation3 [shape = 's32[1]{0}', space=sflag, size = 0x4, scoped, tag = 'scoped memory for tpu_custom_call.1']
    #allocation4 [shape = 's32[1]{0}', space=sflag, size = 0x4, scoped, tag = 'scoped memory for tpu_custom_call.1']
    #allocation5 [shape = 'u8[2048]{0}', space=vmem, size = 0x800, scoped, tag = 'output window, operand 0, single buffered']
    %7 = vsyncpa [#allocation3], 0
    %8 = vsyncpa [#allocation4], 0
    // Predicated region
    $region2: #{tpu_custom_call.1} parent=1 // pred_check
      _
    $region3: #{tpu_custom_call.1} parent=1 // pred_check_branch
      %10 = sbr.rel (0) target = $region5
    $region4: #{tpu_custom_call.1} parent=1 // pred_region
      %s12 = ssub.s32 64, 64
      %13 = vsyncadd [#allocation3], %s12
      %s15 = sshll.u32 [#allocation2], 4
      %s16 = int_to_ptr.vmem [resolvable:$true] %s15
      %18 = dma.hbm_to_vmem [thread:$0]  %s0, 64, %s16, [#allocation3]
    $region5: #{tpu_custom_call.1} parent=1 // pred_fallthru
      _
    // Predicated region
    $region6: #{tpu_custom_call.1} parent=1 // pred_check
      _
    $region7: #{tpu_custom_call.1} parent=1 // pred_check_branch
      %20 = sbr.rel (0) target = $region9
    $region8: #{tpu_custom_call.1} parent=1 // pred_region
      _
    $region9: #{tpu_custom_call.1} parent=1 // pred_fallthru
      _
    // Predicated region
    $region10: #{tpu_custom_call.1} parent=1 // pred_check
      _
    $region11: #{tpu_custom_call.1} parent=1 // pred_check_branch
      %22 = sbr.rel (0) target = $region13
    $region12: #{tpu_custom_call.1} parent=1 // pred_region
      %23 = dma.done [#allocation3], 64
    $region13: #{tpu_custom_call.1} parent=1 // pred_fallthru
      _
    %v24 = vld [vmem:[#allocation2] sm:$0xf]
    %v25 = vld [vmem:[%s1] sm:$0x3]
    %v27 = vlaneseq
    %v28 = vshrl.u32 %v27, 7
    %v29 = vsub.s32 0, %v28
    %v30 = vrot.slane %v25, %v29
    %v31 = vlaneseq
    %v32 = vshrl.u32 %v31, 7
    %v33 = vsub.s32 1, %v32
    %v34 = vrot.slane %v25, %v33
    %v35 = vcombine.low %v30, %v34
    %v37 = vunpack.c.l.s4 1983009808
    %v38 = vunpack.c.0.s8 %v37
    %v39 = vlaneseq
    %v40 = vshrl.u32 %v39, 7
    %v41 = vsub.s32 %v38, %v40
    %v42 = vrot.slane %v35, %v41
    %v44 = vadd.f32 %v24, %v42
    %45 = vst [vmem:[#allocation5] sm:$0xf] %v44
    // Predicated region
    $region14: #{tpu_custom_call.1} parent=1 // pred_check
      _
    $region15: #{tpu_custom_call.1} parent=1 // pred_check_branch
      %47 = sbr.rel (0) target = $region17
    $region16: #{tpu_custom_call.1} parent=1 // pred_region
      %s49 = ssub.s32 64, 64
      %50 = vsyncadd [#allocation4], %s49
      %s52 = sshll.u32 [#allocation5], 4
      %s53 = int_to_ptr.vmem [resolvable:$true] %s52
      %55 = dma.vmem_to_hbm [thread:$0]  %s53, 64, %s2, [#allocation4]
    $region17: #{tpu_custom_call.1} parent=1 // pred_fallthru
      _
    // Predicated region
    $region18: #{tpu_custom_call.1} parent=1 // pred_check
      _
    $region19: #{tpu_custom_call.1} parent=1 // pred_check_branch
      %57 = sbr.rel (0) target = $region21
    $region20: #{tpu_custom_call.1} parent=1 // pred_region
      %58 = dma.done [#allocation4], 64
    $region21: #{tpu_custom_call.1} parent=1 // pred_fallthru
      _
    %59 = vsyncpa [#allocation3], 1
    %60 = vsyncpa [#allocation4], 1

</llo_original>
